<compile_context>
chip_gen: v5e
topology: v5e:2x2
jax: 0.10.0
libtpu: 0.0.40
codegen_flags: <defaults>
</compile_context>

<pallas_src>
import functools

import jax
import jax.numpy as jnp
from jax.experimental import pallas as pl
from jax.experimental.pallas import tpu as pltpu


def _round_up(v, m):
    return -(-v // m) * m


def _softplus_beta(x, beta):
    # PyTorch Softplus(beta, threshold=20): (1/beta)*log(1+exp(beta*x)),
    # reverts to identity when beta*x > 20.
    z = beta * x
    safe = jnp.minimum(z, 20.0)  # keep the untaken branch overflow-free
    return jnp.where(z > 20.0, x, jnp.log1p(jnp.exp(safe)) / beta)


def _net_kernel(x_ref,
                w1, b1, w2, b2, w3, b3, w4, b4, w5, b5,
                w67, b67,
                out_ref, *, softplus_beta):
    def dense_relu(h, w_ref, b_ref):
        # MXU matmul with f32 accumulation; bias + ReLU in f32; cast back to
        # the operand dtype (bf16 by default, f32 if requested) for the next
        # matmul.
        y = jnp.dot(h, w_ref[...], preferred_element_type=jnp.float32) + b_ref[...]
        y = jnp.maximum(y, 0.0)
        return y.astype(w_ref.dtype)

    # In-kernel cast: x arrives in f32, is cast per-tile in VMEM (no extra
    # wrapper-side HBM pass).
    h = x_ref[...].astype(w1.dtype)
    h = dense_relu(h, w1, b1)      # linear1 + relu
    h = dense_relu(h, w2, b2)      # linear2 + relu
    h = dense_relu(h, w3, b3)      # linear3 + relu
    # dropout1: identity in eval mode
    h = dense_relu(h, w4, b4)      # linear4 + relu
    h = dense_relu(h, w5, b5)      # linear5 + relu
    # dropout2: identity in eval mode
    # TODO(synk): training-mode dropout (p=0.1) not implemented; forward here
    # matches eval-mode semantics (identity).

    # Fused heads: columns [0:O) are linear6 (beta), [O:2O) are linear7 (eta),
    # remaining lanes (if any) are zero-padding sliced off in the wrapper.
    head = jnp.dot(h, w67[...], preferred_element_type=jnp.float32) + b67[...]
    out_ref[...] = _softplus_beta(head, softplus_beta).astype(out_ref.dtype)


def init_params(key, input_dim, output_dim):
    """Deterministic PyTorch-like Linear init: U(-1/sqrt(fan_in), 1/sqrt(fan_in))."""
    dims = [(input_dim, 128), (128, 64), (64, 32), (32, 16), (16, 8),
            (8, output_dim), (8, output_dim)]
    params = []
    for fan_in, fan_out in dims:
        key, kw, kb = jax.random.split(key, 3)
        bound = 1.0 / (fan_in ** 0.5)
        # Stored already transposed: [in, out]
        w = jax.random.uniform(kw, (fan_in, fan_out), jnp.float32, -bound, bound)
        b = jax.random.uniform(kb, (1, fan_out), jnp.float32, -bound, bound)
        params.append((w, b))
    return params


def _pack_params(params, output_dim, matmul_dtype, head_w):
    (w1, b1), (w2, b2), (w3, b3), (w4, b4), (w5, b5), (w6, b6), (w7, b7) = params
    # Fuse the two heads; pad only up to head_w (2*output_dim rounded to 8).
    w67 = jnp.concatenate([w6, w7], axis=1)
    b67 = jnp.concatenate([b6, b7], axis=1)
    pad = head_w - 2 * output_dim
    if pad:
        w67 = jnp.pad(w67, ((0, 0), (0, pad)))
        b67 = jnp.pad(b67, ((0, 0), (0, pad)))
    flat = []
    for w, b in [(w1, b1), (w2, b2), (w3, b3), (w4, b4), (w5, b5), (w67, b67)]:
        flat.append(w.astype(matmul_dtype))     # matmul operand dtype
        flat.append(b.astype(jnp.float32))      # biases stay f32 (added to f32 acc)
    return flat


def net_forward(x, params, output_dim, *, tile_b=None, use_bf16=True):
    # bf16 operands by default on all generations (v5e MXU is natively bf16;
    # all vector math happens on the f32 accumulator).  Set use_bf16=False
    # for an exact f32 path.
    matmul_dtype = jnp.bfloat16 if use_bf16 else jnp.float32
    out_dtype = matmul_dtype

    B, D = x.shape
    softplus_beta = float(output_dim)
    head_w = max(8, _round_up(2 * output_dim, 8))  # lane width of fused head output

    # Tile choice: bf16 packs two rows per sublane -> 16-row alignment; f32
    # only needs 8.  Aim for >= 2 grid steps whenever the batch allows (so
    # the "parallel" axis shards across v7x's two TensorCores) and cap at
    # 2048 rows to keep per-step overhead negligible for large batches while
    # staying far below every generation's scoped VMEM default.
    align = 16 if use_bf16 else 8
    if tile_b is None:
        cap = 2048
        if B > align:
            tile_b = min(cap, _round_up(_round_up(B, 2) // 2, align))
        else:
            tile_b = align
    else:
        tile_b = max(align, (tile_b // align) * align)
    grid_b = pl.cdiv(B, tile_b)  # ragged last tile handled by Pallas masking

    flat = _pack_params(params, output_dim, matmul_dtype, head_w)

    in_specs = [pl.BlockSpec((tile_b, D), lambda i: (i, 0))]
    for p in flat:
        # Grid-invariant block (constant index_map) -> fetched once, resident
        # in VMEM for the whole grid.
        in_specs.append(pl.BlockSpec(p.shape, lambda i: (0, 0)))

    out_spec = pl.BlockSpec((tile_b, head_w), lambda i: (i, 0))

    kernel = functools.partial(_net_kernel, softplus_beta=softplus_beta)

    out = pl.pallas_call(
        kernel,
        out_shape=jax.ShapeDtypeStruct((B, head_w), out_dtype),
        grid_spec=pltpu.PrefetchScalarGridSpec(
            num_scalar_prefetch=0,
            grid=(grid_b,),
            in_specs=in_specs,
            out_specs=out_spec,
        ),
        compiler_params=pltpu.CompilerParams(
            dimension_semantics=("parallel",)),
    )(x.astype(jnp.float32), *flat)

    out = out[:B].astype(jnp.float32)
    beta = out[:, :output_dim]
    eta = out[:, output_dim:2 * output_dim]
    return beta, eta


if __name__ == "__main__":
    input_dim = 16
    output_dim = 2
    batch = 16

    key = jax.random.PRNGKey(0)
    key, kx = jax.random.split(key)
    x = jax.random.normal(kx, (batch, input_dim), jnp.float32)
    params = init_params(key, input_dim, output_dim)

    beta_out, eta_out = net_forward(x, params, output_dim)
    jax.block_until_ready((beta_out, eta_out))

    # Pure-JAX f32 reference of the same forward pass (semantics check).
    def ref_forward(xv, ps):
        h = xv
        for (w, b) in ps[:5]:
            h = jnp.maximum(h @ w + b, 0.0)
        (w6, b6), (w7, b7) = ps[5], ps[6]
        sp = lambda z: _softplus_beta(z, float(output_dim))
        return sp(h @ w6 + b6), sp(h @ w7 + b7)

    beta_ref, eta_ref = ref_forward(x, params)

    assert beta_out.shape == (batch, output_dim)
    assert eta_out.shape == (batch, output_dim)
    assert bool(jnp.all(jnp.isfinite(beta_out)))
    assert bool(jnp.all(jnp.isfinite(eta_out)))
    # Softplus outputs are strictly positive.
    assert bool(jnp.all(beta_out > 0))
    assert bool(jnp.all(eta_out > 0))
    # Tolerance sized for the bf16 operand + bf16 output path (f32 path is
    # exact to rounding).
    assert bool(jnp.allclose(beta_out, beta_ref, rtol=4e-2, atol=4e-2))
    assert bool(jnp.allclose(eta_out, eta_ref, rtol=4e-2, atol=4e-2))
    print("KERNEL_OK")
</pallas_src>

<mosaic_0001>
module attributes {stable_mosaic.version = 11 : i64} {
  func.func @_net_kernel(%arg0: i32, %arg1: memref<16x16xf32, #tpu.memory_space<vmem>>, %arg2: memref<16x128xbf16, #tpu.memory_space<vmem>>, %arg3: memref<1x128xf32, #tpu.memory_space<vmem>>, %arg4: memref<128x64xbf16, #tpu.memory_space<vmem>>, %arg5: memref<1x64xf32, #tpu.memory_space<vmem>>, %arg6: memref<64x32xbf16, #tpu.memory_space<vmem>>, %arg7: memref<1x32xf32, #tpu.memory_space<vmem>>, %arg8: memref<32x16xbf16, #tpu.memory_space<vmem>>, %arg9: memref<1x16xf32, #tpu.memory_space<vmem>>, %arg10: memref<16x8xbf16, #tpu.memory_space<vmem>>, %arg11: memref<1x8xf32, #tpu.memory_space<vmem>>, %arg12: memref<8x8xbf16, #tpu.memory_space<vmem>>, %arg13: memref<1x8xf32, #tpu.memory_space<vmem>>, %arg14: memref<16x8xbf16, #tpu.memory_space<vmem>>) attributes {dimension_semantics = [#tpu.dimension_semantics<parallel>], iteration_bounds = array<i64: 1>, scalar_prefetch = 0 : i64, scratch_operands = 0 : i64, tpu.core_type = #tpu.core_type<tc>, window_params = [{transform_indices = @transform_0, window_bounds = array<i64: 16, 16>}, {pipeline_mode = #tpu.pipeline_mode<synchronous>, transform_indices = @transform_1, window_bounds = array<i64: 16, 128>}, {pipeline_mode = #tpu.pipeline_mode<synchronous>, transform_indices = @transform_2, window_bounds = array<i64: 1, 128>}, {pipeline_mode = #tpu.pipeline_mode<synchronous>, transform_indices = @transform_3, window_bounds = array<i64: 128, 64>}, {pipeline_mode = #tpu.pipeline_mode<synchronous>, transform_indices = @transform_4, window_bounds = array<i64: 1, 64>}, {pipeline_mode = #tpu.pipeline_mode<synchronous>, transform_indices = @transform_5, window_bounds = array<i64: 64, 32>}, {pipeline_mode = #tpu.pipeline_mode<synchronous>, transform_indices = @transform_6, window_bounds = array<i64: 1, 32>}, {pipeline_mode = #tpu.pipeline_mode<synchronous>, transform_indices = @transform_7, window_bounds = array<i64: 32, 16>}, {pipeline_mode = #tpu.pipeline_mode<synchronous>, transform_indices = @transform_8, window_bounds = array<i64: 1, 16>}, {pipeline_mode = #tpu.pipeline_mode<synchronous>, transform_indices = @transform_9, window_bounds = array<i64: 16, 8>}, {pipeline_mode = #tpu.pipeline_mode<synchronous>, transform_indices = @transform_10, window_bounds = array<i64: 1, 8>}, {pipeline_mode = #tpu.pipeline_mode<synchronous>, transform_indices = @transform_11, window_bounds = array<i64: 8, 8>}, {pipeline_mode = #tpu.pipeline_mode<synchronous>, transform_indices = @transform_12, window_bounds = array<i64: 1, 8>}, {transform_indices = @transform_13, window_bounds = array<i64: 16, 8>}]} {
    %c0 = arith.constant 0 : index
    %c0_0 = arith.constant 0 : index
    %0 = vector.load %arg1[%c0, %c0_0] : memref<16x16xf32, #tpu.memory_space<vmem>>, vector<16x16xf32>
    %1 = arith.truncf %0 : vector<16x16xf32> to vector<16x16xbf16>
    %c0_1 = arith.constant 0 : index
    %c0_2 = arith.constant 0 : index
    %2 = vector.load %arg2[%c0_1, %c0_2] : memref<16x128xbf16, #tpu.memory_space<vmem>>, vector<16x128xbf16>
    %cst = arith.constant dense<0.000000e+00> : vector<16x128xf32>
    %3 = tpu.matmul %1, %2, %cst {dimension_numbers = #tpu.dot_dimension_numbers<[1], [0], [0], [1], [0, 0, 1, 1], [], []>} : vector<16x16xbf16>, vector<16x128xbf16>, vector<16x128xf32> -> vector<16x128xf32>
    %c0_3 = arith.constant 0 : index
    %c0_4 = arith.constant 0 : index
    %4 = vector.load %arg3[%c0_3, %c0_4] : memref<1x128xf32, #tpu.memory_space<vmem>>, vector<1x128xf32>
    %5 = vector.broadcast %4 : vector<1x128xf32> to vector<16x128xf32>
    %6 = arith.addf %3, %5 : vector<16x128xf32>
    %cst_5 = arith.constant 0.000000e+00 : f32
    %7 = vector.broadcast %cst_5 : f32 to vector<16x128xf32>
    %8 = arith.maximumf %6, %7 : vector<16x128xf32>
    %9 = arith.truncf %8 : vector<16x128xf32> to vector<16x128xbf16>
    %c0_6 = arith.constant 0 : index
    %c0_7 = arith.constant 0 : index
    %10 = vector.load %arg4[%c0_6, %c0_7] : memref<128x64xbf16, #tpu.memory_space<vmem>>, vector<128x64xbf16>
    %cst_8 = arith.constant dense<0.000000e+00> : vector<16x64xf32>
    %11 = tpu.matmul %9, %10, %cst_8 {dimension_numbers = #tpu.dot_dimension_numbers<[1], [0], [0], [1], [0, 0, 1, 1], [], []>} : vector<16x128xbf16>, vector<128x64xbf16>, vector<16x64xf32> -> vector<16x64xf32>
    %c0_9 = arith.constant 0 : index
    %c0_10 = arith.constant 0 : index
    %12 = vector.load %arg5[%c0_9, %c0_10] : memref<1x64xf32, #tpu.memory_space<vmem>>, vector<1x64xf32>
    %13 = vector.broadcast %12 : vector<1x64xf32> to vector<16x64xf32>
    %14 = arith.addf %11, %13 : vector<16x64xf32>
    %cst_11 = arith.constant 0.000000e+00 : f32
    %15 = vector.broadcast %cst_11 : f32 to vector<16x64xf32>
    %16 = arith.maximumf %14, %15 : vector<16x64xf32>
    %17 = arith.truncf %16 : vector<16x64xf32> to vector<16x64xbf16>
    %c0_12 = arith.constant 0 : index
    %c0_13 = arith.constant 0 : index
    %18 = vector.load %arg6[%c0_12, %c0_13] : memref<64x32xbf16, #tpu.memory_space<vmem>>, vector<64x32xbf16>
    %cst_14 = arith.constant dense<0.000000e+00> : vector<16x32xf32>
    %19 = tpu.matmul %17, %18, %cst_14 {dimension_numbers = #tpu.dot_dimension_numbers<[1], [0], [0], [1], [0, 0, 1, 1], [], []>} : vector<16x64xbf16>, vector<64x32xbf16>, vector<16x32xf32> -> vector<16x32xf32>
    %c0_15 = arith.constant 0 : index
    %c0_16 = arith.constant 0 : index
    %20 = vector.load %arg7[%c0_15, %c0_16] : memref<1x32xf32, #tpu.memory_space<vmem>>, vector<1x32xf32>
    %21 = vector.broadcast %20 : vector<1x32xf32> to vector<16x32xf32>
    %22 = arith.addf %19, %21 : vector<16x32xf32>
    %cst_17 = arith.constant 0.000000e+00 : f32
    %23 = vector.broadcast %cst_17 : f32 to vector<16x32xf32>
    %24 = arith.maximumf %22, %23 : vector<16x32xf32>
    %25 = arith.truncf %24 : vector<16x32xf32> to vector<16x32xbf16>
    %c0_18 = arith.constant 0 : index
    %c0_19 = arith.constant 0 : index
    %26 = vector.load %arg8[%c0_18, %c0_19] : memref<32x16xbf16, #tpu.memory_space<vmem>>, vector<32x16xbf16>
    %cst_20 = arith.constant dense<0.000000e+00> : vector<16x16xf32>
    %27 = tpu.matmul %25, %26, %cst_20 {dimension_numbers = #tpu.dot_dimension_numbers<[1], [0], [0], [1], [0, 0, 1, 1], [], []>} : vector<16x32xbf16>, vector<32x16xbf16>, vector<16x16xf32> -> vector<16x16xf32>
    %c0_21 = arith.constant 0 : index
    %c0_22 = arith.constant 0 : index
    %28 = vector.load %arg9[%c0_21, %c0_22] : memref<1x16xf32, #tpu.memory_space<vmem>>, vector<1x16xf32>
    %29 = vector.broadcast %28 : vector<1x16xf32> to vector<16x16xf32>
    %30 = arith.addf %27, %29 : vector<16x16xf32>
    %cst_23 = arith.constant 0.000000e+00 : f32
    %31 = vector.broadcast %cst_23 : f32 to vector<16x16xf32>
    %32 = arith.maximumf %30, %31 : vector<16x16xf32>
    %33 = arith.truncf %32 : vector<16x16xf32> to vector<16x16xbf16>
    %c0_24 = arith.constant 0 : index
    %c0_25 = arith.constant 0 : index
    %34 = vector.load %arg10[%c0_24, %c0_25] : memref<16x8xbf16, #tpu.memory_space<vmem>>, vector<16x8xbf16>
    %cst_26 = arith.constant dense<0.000000e+00> : vector<16x8xf32>
    %35 = tpu.matmul %33, %34, %cst_26 {dimension_numbers = #tpu.dot_dimension_numbers<[1], [0], [0], [1], [0, 0, 1, 1], [], []>} : vector<16x16xbf16>, vector<16x8xbf16>, vector<16x8xf32> -> vector<16x8xf32>
    %c0_27 = arith.constant 0 : index
    %c0_28 = arith.constant 0 : index
    %36 = vector.load %arg11[%c0_27, %c0_28] : memref<1x8xf32, #tpu.memory_space<vmem>>, vector<1x8xf32>
    %37 = vector.broadcast %36 : vector<1x8xf32> to vector<16x8xf32>
    %38 = arith.addf %35, %37 : vector<16x8xf32>
    %cst_29 = arith.constant 0.000000e+00 : f32
    %39 = vector.broadcast %cst_29 : f32 to vector<16x8xf32>
    %40 = arith.maximumf %38, %39 : vector<16x8xf32>
    %41 = arith.truncf %40 : vector<16x8xf32> to vector<16x8xbf16>
    %c0_30 = arith.constant 0 : index
    %c0_31 = arith.constant 0 : index
    %42 = vector.load %arg12[%c0_30, %c0_31] : memref<8x8xbf16, #tpu.memory_space<vmem>>, vector<8x8xbf16>
    %cst_32 = arith.constant dense<0.000000e+00> : vector<16x8xf32>
    %43 = tpu.matmul %41, %42, %cst_32 {dimension_numbers = #tpu.dot_dimension_numbers<[1], [0], [0], [1], [0, 0, 1, 1], [], []>} : vector<16x8xbf16>, vector<8x8xbf16>, vector<16x8xf32> -> vector<16x8xf32>
    %c0_33 = arith.constant 0 : index
    %c0_34 = arith.constant 0 : index
    %44 = vector.load %arg13[%c0_33, %c0_34] : memref<1x8xf32, #tpu.memory_space<vmem>>, vector<1x8xf32>
    %45 = vector.broadcast %44 : vector<1x8xf32> to vector<16x8xf32>
    %46 = arith.addf %43, %45 : vector<16x8xf32>
    %cst_35 = arith.constant 2.000000e+00 : f32
    %47 = vector.broadcast %cst_35 : f32 to vector<16x8xf32>
    %48 = arith.mulf %47, %46 : vector<16x8xf32>
    %cst_36 = arith.constant 2.000000e+01 : f32
    %49 = vector.broadcast %cst_36 : f32 to vector<16x8xf32>
    %50 = arith.minimumf %48, %49 : vector<16x8xf32>
    %cst_37 = arith.constant 2.000000e+01 : f32
    %51 = vector.broadcast %cst_37 : f32 to vector<16x8xf32>
    %52 = arith.cmpf ogt, %48, %51 : vector<16x8xf32>
    %53 = math.exp %50 : vector<16x8xf32>
    %54 = math.log1p %53 : vector<16x8xf32>
    %cst_38 = arith.constant 2.000000e+00 : f32
    %55 = vector.broadcast %cst_38 : f32 to vector<16x8xf32>
    %56 = arith.divf %54, %55 : vector<16x8xf32>
    %57 = arith.select %52, %46, %56 : vector<16x8xi1>, vector<16x8xf32>
    %58 = arith.truncf %57 : vector<16x8xf32> to vector<16x8xbf16>
    %c0_39 = arith.constant 0 : index
    %c0_40 = arith.constant 0 : index
    %59 = vector.load %arg14[%c0_39, %c0_40] : memref<16x8xbf16, #tpu.memory_space<vmem>>, vector<16x8xbf16>
    tpu.vector_store %arg14[%c0_39, %c0_40], %58 {strides = array<i32>} : memref<16x8xbf16, #tpu.memory_space<vmem>>, vector<16x8xbf16>,
    return
  }
  func.func @transform_0(%arg0: i32) -> (i32, i32) {
    %c0_i32 = arith.constant 0 : i32
    %c0_i32_0 = arith.constant 0 : i32
    return %arg0, %c0_i32 : i32, i32
  }
  func.func @transform_1(%arg0: i32) -> (i32, i32) {
    %c0_i32 = arith.constant 0 : i32
    %c0_i32_0 = arith.constant 0 : i32
    %c0_i32_1 = arith.constant 0 : i32
    return %c0_i32, %c0_i32_0 : i32, i32
  }
  func.func @transform_2(%arg0: i32) -> (i32, i32) {
    %c0_i32 = arith.constant 0 : i32
    %c0_i32_0 = arith.constant 0 : i32
    %c0_i32_1 = arith.constant 0 : i32
    return %c0_i32, %c0_i32_0 : i32, i32
  }
  func.func @transform_3(%arg0: i32) -> (i32, i32) {
    %c0_i32 = arith.constant 0 : i32
    %c0_i32_0 = arith.constant 0 : i32
    %c0_i32_1 = arith.constant 0 : i32
    return %c0_i32, %c0_i32_0 : i32, i32
  }
  func.func @transform_4(%arg0: i32) -> (i32, i32) {
    %c0_i32 = arith.constant 0 : i32
    %c0_i32_0 = arith.constant 0 : i32
    %c0_i32_1 = arith.constant 0 : i32
    return %c0_i32, %c0_i32_0 : i32, i32
  }
  func.func @transform_5(%arg0: i32) -> (i32, i32) {
    %c0_i32 = arith.constant 0 : i32
    %c0_i32_0 = arith.constant 0 : i32
    %c0_i32_1 = arith.constant 0 : i32
    return %c0_i32, %c0_i32_0 : i32, i32
  }
  func.func @transform_6(%arg0: i32) -> (i32, i32) {
    %c0_i32 = arith.constant 0 : i32
    %c0_i32_0 = arith.constant 0 : i32
    %c0_i32_1 = arith.constant 0 : i32
    return %c0_i32, %c0_i32_0 : i32, i32
  }
  func.func @transform_7(%arg0: i32) -> (i32, i32) {
    %c0_i32 = arith.constant 0 : i32
    %c0_i32_0 = arith.constant 0 : i32
    %c0_i32_1 = arith.constant 0 : i32
    return %c0_i32, %c0_i32_0 : i32, i32
  }
  func.func @transform_8(%arg0: i32) -> (i32, i32) {
    %c0_i32 = arith.constant 0 : i32
    %c0_i32_0 = arith.constant 0 : i32
    %c0_i32_1 = arith.constant 0 : i32
    return %c0_i32, %c0_i32_0 : i32, i32
  }
  func.func @transform_9(%arg0: i32) -> (i32, i32) {
    %c0_i32 = arith.constant 0 : i32
    %c0_i32_0 = arith.constant 0 : i32
    %c0_i32_1 = arith.constant 0 : i32
    return %c0_i32, %c0_i32_0 : i32, i32
  }
  func.func @transform_10(%arg0: i32) -> (i32, i32) {
    %c0_i32 = arith.constant 0 : i32
    %c0_i32_0 = arith.constant 0 : i32
    %c0_i32_1 = arith.constant 0 : i32
    return %c0_i32, %c0_i32_0 : i32, i32
  }
  func.func @transform_11(%arg0: i32) -> (i32, i32) {
    %c0_i32 = arith.constant 0 : i32
    %c0_i32_0 = arith.constant 0 : i32
    %c0_i32_1 = arith.constant 0 : i32
    return %c0_i32, %c0_i32_0 : i32, i32
  }
  func.func @transform_12(%arg0: i32) -> (i32, i32) {
    %c0_i32 = arith.constant 0 : i32
    %c0_i32_0 = arith.constant 0 : i32
    %c0_i32_1 = arith.constant 0 : i32
    return %c0_i32, %c0_i32_0 : i32, i32
  }
  func.func @transform_13(%arg0: i32) -> (i32, i32) {
    %c0_i32 = arith.constant 0 : i32
    %c0_i32_0 = arith.constant 0 : i32
    return %arg0, %c0_i32 : i32, i32
  }
}

</mosaic_0001>

<llo_original>
// kernel: tpu_custom_call.1
$region0: #{tpu_custom_call.1}
  #allocation0 [shape = 'u32[]', space=smem, size = 0x4, offset = 0x4, fixed_abs, tag = 'smem constant byte address 0x4 - core index']
  #allocation1 [shape = 'u32[72,128]{1,0:T(1,128)}', space=vmem, size = 0x9000, scoped, tag = 'internal scratch']
  %s0 = inlined_call_operand.vmem [shape: f32[16,16], index: 0, kind: input, shape index: {}]
  %s1 = inlined_call_operand.vmem [shape: bf16[16,128], index: 1, kind: input, shape index: {}]
  %s2 = inlined_call_operand.vmem [shape: f32[1,128], index: 2, kind: input, shape index: {}]
  %s3 = inlined_call_operand.vmem [shape: bf16[128,64], index: 3, kind: input, shape index: {}]
  %s4 = inlined_call_operand.vmem [shape: f32[1,64], index: 4, kind: input, shape index: {}]
  %s5 = inlined_call_operand.vmem [shape: bf16[64,32], index: 5, kind: input, shape index: {}]
  %s6 = inlined_call_operand.vmem [shape: f32[1,32], index: 6, kind: input, shape index: {}]
  %s7 = inlined_call_operand.vmem [shape: bf16[32,16], index: 7, kind: input, shape index: {}]
  %s8 = inlined_call_operand.vmem [shape: f32[1,16], index: 8, kind: input, shape index: {}]
  %s9 = inlined_call_operand.vmem [shape: bf16[16,8], index: 9, kind: input, shape index: {}]
  %s10 = inlined_call_operand.vmem [shape: f32[1,8], index: 10, kind: input, shape index: {}]
  %s11 = inlined_call_operand.vmem [shape: bf16[8,8], index: 11, kind: input, shape index: {}]
  %s12 = inlined_call_operand.vmem [shape: f32[1,8], index: 12, kind: input, shape index: {}]
  %s13 = inlined_call_operand.vmem [shape: bf16[16,8], index: 13, kind: output, shape index: {}]
  %s14 = sld [smem:[#allocation0]]
  $region62: #{tpu_custom_call.1} parent=0
    _
  %s16 = ssub.s32 1, %s14
  %s17 = scalar_select 0, %s16, %s14
  // Predicated region
  $region2: #{tpu_custom_call.1} parent=0 // pred_check
    _
  $region3: #{tpu_custom_call.1} parent=0 // pred_check_branch
    %19 = sbr.rel (0) target = $region5
  $region4: #{tpu_custom_call.1} parent=0 // pred_region
    _
  $region5: #{tpu_custom_call.1} parent=0 // pred_fallthru
    _
  // Predicated region
  $region6: #{tpu_custom_call.1} parent=0 // pred_check
    _
  $region7: #{tpu_custom_call.1} parent=0 // pred_check_branch
    %21 = sbr.rel (0) target = $region9
  $region8: #{tpu_custom_call.1} parent=0 // pred_region
    _
  $region9: #{tpu_custom_call.1} parent=0 // pred_fallthru
    _
  // Predicated region
  $region10: #{tpu_custom_call.1} parent=0 // pred_check
    _
  $region11: #{tpu_custom_call.1} parent=0 // pred_check_branch
    %23 = sbr.rel (0) target = $region13
  $region12: #{tpu_custom_call.1} parent=0 // pred_region
    _
  $region13: #{tpu_custom_call.1} parent=0 // pred_fallthru
    _
  // Predicated region
  $region14: #{tpu_custom_call.1} parent=0 // pred_check
    _
  $region15: #{tpu_custom_call.1} parent=0 // pred_check_branch
    %25 = sbr.rel (0) target = $region17
  $region16: #{tpu_custom_call.1} parent=0 // pred_region
    _
  $region17: #{tpu_custom_call.1} parent=0 // pred_fallthru
    _
  // Predicated region
  $region18: #{tpu_custom_call.1} parent=0 // pred_check
    _
  $region19: #{tpu_custom_call.1} parent=0 // pred_check_branch
    %27 = sbr.rel (0) target = $region21
  $region20: #{tpu_custom_call.1} parent=0 // pred_region
    _
  $region21: #{tpu_custom_call.1} parent=0 // pred_fallthru
    _
  // Predicated region
  $region22: #{tpu_custom_call.1} parent=0 // pred_check
    _
  $region23: #{tpu_custom_call.1} parent=0 // pred_check_branch
    %29 = sbr.rel (0) target = $region25
  $region24: #{tpu_custom_call.1} parent=0 // pred_region
    _
  $region25: #{tpu_custom_call.1} parent=0 // pred_fallthru
    _
  // Predicated region
  $region26: #{tpu_custom_call.1} parent=0 // pred_check
    _
  $region27: #{tpu_custom_call.1} parent=0 // pred_check_branch
    %31 = sbr.rel (0) target = $region29
  $region28: #{tpu_custom_call.1} parent=0 // pred_region
    _
  $region29: #{tpu_custom_call.1} parent=0 // pred_fallthru
    _
  // Predicated region
  $region30: #{tpu_custom_call.1} parent=0 // pred_check
    _
  $region31: #{tpu_custom_call.1} parent=0 // pred_check_branch
    %33 = sbr.rel (0) target = $region33
  $region32: #{tpu_custom_call.1} parent=0 // pred_region
    _
  $region33: #{tpu_custom_call.1} parent=0 // pred_fallthru
    _
  // Predicated region
  $region34: #{tpu_custom_call.1} parent=0 // pred_check
    _
  $region35: #{tpu_custom_call.1} parent=0 // pred_check_branch
    %35 = sbr.rel (0) target = $region37
  $region36: #{tpu_custom_call.1} parent=0 // pred_region
    _
  $region37: #{tpu_custom_call.1} parent=0 // pred_fallthru
    _
  // Predicated region
  $region38: #{tpu_custom_call.1} parent=0 // pred_check
    _
  $region39: #{tpu_custom_call.1} parent=0 // pred_check_branch
    %37 = sbr.rel (0) target = $region41
  $region40: #{tpu_custom_call.1} parent=0 // pred_region
    _
  $region41: #{tpu_custom_call.1} parent=0 // pred_fallthru
    _
  // Predicated region
  $region42: #{tpu_custom_call.1} parent=0 // pred_check
    _
  $region43: #{tpu_custom_call.1} parent=0 // pred_check_branch
    %39 = sbr.rel (0) target = $region45
  $region44: #{tpu_custom_call.1} parent=0 // pred_region
    _
  $region45: #{tpu_custom_call.1} parent=0 // pred_fallthru
    _
  // Predicated region
  $region46: #{tpu_custom_call.1} parent=0 // pred_check
    _
  $region47: #{tpu_custom_call.1} parent=0 // pred_check_branch
    %41 = sbr.rel (0) target = $region49
  $region48: #{tpu_custom_call.1} parent=0 // pred_region
    _
  $region49: #{tpu_custom_call.1} parent=0 // pred_fallthru
    _
  // Predicated region
  $region50: #{tpu_custom_call.1} parent=0 // pred_check
    _
  $region51: #{tpu_custom_call.1} parent=0 // pred_check_branch
    %43 = sbr.rel (0) target = $region53
  $region52: #{tpu_custom_call.1} parent=0 // pred_region
    _
  $region53: #{tpu_custom_call.1} parent=0 // pred_fallthru
    _
  %v45 = vld [vmem:[%s0] sm:$0xff]
  %v46 = vld [vmem:[%s0 + $0x8] sm:$0xff]
  %v47 = vpack.c.bf16 %v46, %v45
  %v48 = vld [vmem:[%s1] sm:$0xf]
  %v49 = vld [vmem:[%s1 + $0x4] sm:$0xf]
  %v50 = vld [vmem:[%s2] sm:$0x1]
  %v52 = vperm.slane %v50, 0
  %v56 = vunpack.c.l.b16 %v48
  %v57 = vunpack.c.l.b16 %v49
  %v58 = vpack.c.b16 %v57, %v56
  %vm60 = vcmask 130048
  %v62 = vsel %vm60, %v47, 0
  %64 = vmatpush.bf16.msra.mxu0 0
  %65 = vmatpush.bf16.msra.mxu0 0
  %66 = vmatpush.bf16.msra.mxu0 0
  %67 = vmatpush.bf16.msra.mxu0 0
  %68 = vmatpush.bf16.msra.mxu0 0
  %69 = vmatpush.bf16.msra.mxu0 0
  %70 = vmatpush.bf16.msra.mxu0 0
  %71 = vmatpush.bf16.msra.mxu0 %v58
  %72 = vmatmul.bf16.gmra.mxu0 %v62
  %v73 = vpop.f32.mrf.mxu0
  %v74 = vadd.f32 %v52, %v73
  %v75 = vpop.f32.mrf.mxu0
  %v76 = vadd.f32 %v52, %v75
  %77 = vdwg.mxu0
  %v78 = vmax.f32 %v74, 0.0
  %v79 = vmax.f32 %v76, 0.0
  %v80 = vpack.c.bf16 %v79, %v78
  %v81 = vld [vmem:[%s3] sm:$0xf]
  %v82 = vld [vmem:[%s3 + $0x4] sm:$0xf]
  %v83 = vld [vmem:[%s3 + $0x8] sm:$0xf]
  %v84 = vld [vmem:[%s3 + $0xc] sm:$0xf]
  %v85 = vld [vmem:[%s3 + $0x10] sm:$0xf]
  %v86 = vld [vmem:[%s3 + $0x14] sm:$0xf]
  %v87 = vld [vmem:[%s3 + $0x18] sm:$0xf]
  %v88 = vld [vmem:[%s3 + $0x1c] sm:$0xf]
  %v89 = vld [vmem:[%s3 + $0x20] sm:$0xf]
  %v90 = vld [vmem:[%s3 + $0x24] sm:$0xf]
  %v91 = vld [vmem:[%s3 + $0x28] sm:$0xf]
  %v92 = vld [vmem:[%s3 + $0x2c] sm:$0xf]
  %v93 = vld [vmem:[%s3 + $0x30] sm:$0xf]
  %v94 = vld [vmem:[%s3 + $0x34] sm:$0xf]
  %v95 = vld [vmem:[%s3 + $0x38] sm:$0xf]
  %v96 = vld [vmem:[%s3 + $0x3c] sm:$0xf]
  %v97 = vld [vmem:[%s4] sm:$0x1]
  %v99 = vperm.slane %v97, 0
  %v117 = vunpack.c.l.b16 %v81
  %v118 = vunpack.c.l.b16 %v82
  %v119 = vunpack.c.l.b16 %v83
  %v120 = vunpack.c.l.b16 %v84
  %v121 = vunpack.c.l.b16 %v85
  %v122 = vunpack.c.l.b16 %v86
  %v123 = vunpack.c.l.b16 %v87
  %v124 = vunpack.c.l.b16 %v88
  %v125 = vunpack.c.l.b16 %v89
  %v126 = vunpack.c.l.b16 %v90
  %v127 = vunpack.c.l.b16 %v91
  %v128 = vunpack.c.l.b16 %v92
  %v129 = vunpack.c.l.b16 %v93
  %v130 = vunpack.c.l.b16 %v94
  %v131 = vunpack.c.l.b16 %v95
  %v132 = vunpack.c.l.b16 %v96
  %v133 = vpack.c.b16 %v118, %v117
  %v134 = vpack.c.b16 %v120, %v119
  %v135 = vpack.c.b16 %v122, %v121
  %v136 = vpack.c.b16 %v124, %v123
  %v137 = vpack.c.b16 %v126, %v125
  %v138 = vpack.c.b16 %v128, %v127
  %v139 = vpack.c.b16 %v130, %v129
  %v140 = vpack.c.b16 %v132, %v131
  %149 = vmatpush.bf16.msra.mxu0 %v140
  %150 = vmatpush.bf16.msra.mxu0 %v139
  %151 = vmatpush.bf16.msra.mxu0 %v138
  %152 = vmatpush.bf16.msra.mxu0 %v137
  %153 = vmatpush.bf16.msra.mxu0 %v136
  %154 = vmatpush.bf16.msra.mxu0 %v135
  %155 = vmatpush.bf16.msra.mxu0 %v134
  %156 = vmatpush.bf16.msra.mxu0 %v133
  %157 = vmatmul.bf16.gmra.mxu0 %v80
  %v158 = vpop.f32.mrf.mxu0
  %v159 = vadd.f32 %v99, %v158
  %v160 = vpop.f32.mrf.mxu0
  %v161 = vadd.f32 %v99, %v160
  %162 = vdwg.mxu0
  %v163 = vmax.f32 %v159, 0.0
  %v164 = vmax.f32 %v161, 0.0
  %v165 = vpack.c.bf16 %v164, %v163
  %v166 = vld [vmem:[%s5] sm:$0xf]
  %v167 = vld [vmem:[%s5 + $0x4] sm:$0xf]
  %v168 = vld [vmem:[%s5 + $0x8] sm:$0xf]
  %v169 = vld [vmem:[%s5 + $0xc] sm:$0xf]
  %v170 = vld [vmem:[%s5 + $0x10] sm:$0xf]
  %v171 = vld [vmem:[%s5 + $0x14] sm:$0xf]
  %v172 = vld [vmem:[%s5 + $0x18] sm:$0xf]
  %v173 = vld [vmem:[%s5 + $0x1c] sm:$0xf]
  %v174 = vld [vmem:[%s6] sm:$0x1]
  %v176 = vperm.slane %v174, 0
  %v186 = vunpack.c.l.b16 %v166
  %v187 = vunpack.c.l.b16 %v167
  %v188 = vunpack.c.l.b16 %v168
  %v189 = vunpack.c.l.b16 %v169
  %v190 = vunpack.c.l.b16 %v170
  %v191 = vunpack.c.l.b16 %v171
  %v192 = vunpack.c.l.b16 %v172
  %v193 = vunpack.c.l.b16 %v173
  %v194 = vpack.c.b16 %v187, %v186
  %v195 = vpack.c.b16 %v189, %v188
  %v196 = vpack.c.b16 %v191, %v190
  %v197 = vpack.c.b16 %v193, %v192
  %vm202 = vcmask 523264
  %v204 = vsel %vm202, %v165, 0
  %206 = vmatpush.bf16.msra.mxu0 0
  %207 = vmatpush.bf16.msra.mxu0 0
  %208 = vmatpush.bf16.msra.mxu0 0
  %209 = vmatpush.bf16.msra.mxu0 0
  %210 = vmatpush.bf16.msra.mxu0 %v197
  %211 = vmatpush.bf16.msra.mxu0 %v196
  %212 = vmatpush.bf16.msra.mxu0 %v195
  %213 = vmatpush.bf16.msra.mxu0 %v194
  %214 = vmatmul.bf16.gmra.mxu0 %v204
  %v215 = vpop.f32.mrf.mxu0
  %v216 = vadd.f32 %v176, %v215
  %v217 = vpop.f32.mrf.mxu0
  %v218 = vadd.f32 %v176, %v217
  %219 = vdwg.mxu0
  %v220 = vmax.f32 %v216, 0.0
  %v221 = vmax.f32 %v218, 0.0
  %v222 = vpack.c.bf16 %v221, %v220
  %v223 = vld [vmem:[%s7] sm:$0xf]
  %v224 = vld [vmem:[%s7 + $0x4] sm:$0xf]
  %v225 = vld [vmem:[%s7 + $0x8] sm:$0xf]
  %v226 = vld [vmem:[%s7 + $0xc] sm:$0xf]
  %v227 = vld [vmem:[%s8] sm:$0x1]
  %v229 = vperm.slane %v227, 0
  %v235 = vunpack.c.l.b16 %v223
  %v236 = vunpack.c.l.b16 %v224
  %v237 = vunpack.c.l.b16 %v225
  %v238 = vunpack.c.l.b16 %v226
  %v239 = vpack.c.b16 %v236, %v235
  %v240 = vpack.c.b16 %v238, %v237
  %vm243 = vcmask 261120
  %v245 = vsel %vm243, %v222, 0
  %247 = vmatpush.bf16.msra.mxu0 0
  %248 = vmatpush.bf16.msra.mxu0 0
  %249 = vmatpush.bf16.msra.mxu0 0
  %250 = vmatpush.bf16.msra.mxu0 0
  %251 = vmatpush.bf16.msra.mxu0 0
  %252 = vmatpush.bf16.msra.mxu0 0
  %253 = vmatpush.bf16.msra.mxu0 %v240
  %254 = vmatpush.bf16.msra.mxu0 %v239
  %255 = vmatmul.bf16.gmra.mxu0 %v245
  %v256 = vpop.f32.mrf.mxu0
  %v257 = vadd.f32 %v229, %v256
  %v258 = vpop.f32.mrf.mxu0
  %v259 = vadd.f32 %v229, %v258
  %260 = vdwg.mxu0
  %v261 = vmax.f32 %v257, 0.0
  %v262 = vmax.f32 %v259, 0.0
  %v263 = vpack.c.bf16 %v262, %v261
  %v264 = vld [vmem:[%s9] sm:$0xf]
  %v265 = vld [vmem:[%s9 + $0x4] sm:$0xf]
  %v266 = vld [vmem:[%s10] sm:$0x1]
  %v268 = vperm.slane %v266, 0
  %v272 = vunpack.c.l.b16 %v264
  %v273 = vunpack.c.l.b16 %v265
  %v274 = vpack.c.b16 %v273, %v272
  %v277 = vsel %vm60, %v263, 0
  %279 = vmatpush.bf16.msra.mxu0 0
  %280 = vmatpush.bf16.msra.mxu0 0
  %281 = vmatpush.bf16.msra.mxu0 0
  %282 = vmatpush.bf16.msra.mxu0 0
  %283 = vmatpush.bf16.msra.mxu0 0
  %284 = vmatpush.bf16.msra.mxu0 0
  %285 = vmatpush.bf16.msra.mxu0 0
  %286 = vmatpush.bf16.msra.mxu0 %v274
  %287 = vmatmul.bf16.gmra.mxu0 %v277
  %v288 = vpop.f32.mrf.mxu0
  %v289 = vadd.f32 %v268, %v288
  %v290 = vpop.f32.mrf.mxu0
  %v291 = vadd.f32 %v268, %v290
  %292 = vdwg.mxu0
  %v293 = vmax.f32 %v289, 0.0
  %v294 = vmax.f32 %v291, 0.0
  %v295 = vpack.c.bf16 %v294, %v293
  %v296 = vld [vmem:[%s11] sm:$0xf]
  %v297 = vld [vmem:[%s12] sm:$0x1]
  %v299 = vperm.slane %v297, 0
  %vm301 = vcmask 64512
  %v303 = vsel %vm301, %v295, 0
  %vm305 = vcmask 1043456
  %v307 = vsel %vm305, %v296, 0
  %309 = vmatpush.bf16.msra.mxu0 0
  %310 = vmatpush.bf16.msra.mxu0 0
  %311 = vmatpush.bf16.msra.mxu0 0
  %312 = vmatpush.bf16.msra.mxu0 0
  %313 = vmatpush.bf16.msra.mxu0 0
  %314 = vmatpush.bf16.msra.mxu0 0
  %315 = vmatpush.bf16.msra.mxu0 0
  %316 = vmatpush.bf16.msra.mxu0 %v307
  %317 = vmatmul.bf16.gmra.mxu0 %v303
  %v318 = vpop.f32.mrf.mxu0
  %v319 = vadd.f32 %v299, %v318
  %v320 = vpop.f32.mrf.mxu0
  %v321 = vadd.f32 %v299, %v320
  %322 = vdwg.mxu0
  %v323 = vmul.f32 %v319, 2.0
  %v324 = vmul.f32 %v321, 2.0
  %v325 = vmin.f32 %v323, 20.0
  %v326 = vmin.f32 %v324, 20.0
  %vm327 = vcmp.gt.f32.partialorder %v323, 20.0
  %vm328 = vcmp.gt.f32.partialorder %v324, 20.0
  %v329 = vmul.f32 %v325, 1.442695
  %v330 = vpow.pop %v329
  %v331 = vmul.f32 %v326, 1.442695
  %v332 = vpow.pop %v331
  %v333 = vadd.f32 %v330, 1.0
  %v334 = vlog2.pop %v333
  %v335 = vmul.f32 %v334, 0.6931472
  %v336 = vmul.f32 -0.5, %v330
  %v337 = vadd.f32 %v336, 1.0
  %v338 = vmul.f32 %v337, %v330
  %v339 = vand.u32 2147483647, %v330
  %vm340 = vcmp.lt.f32.partialorder %v339, 0.0004427343
  %v341 = vsel %vm340, %v338, %v335
  %v342 = vadd.f32 %v332, 1.0
  %v343 = vlog2.pop %v342
  %v344 = vmul.f32 %v343, 0.6931472
  %v345 = vmul.f32 -0.5, %v332
  %v346 = vadd.f32 %v345, 1.0
  %v347 = vmul.f32 %v346, %v332
  %v348 = vand.u32 2147483647, %v332
  %vm349 = vcmp.lt.f32.partialorder %v348, 0.0004427343
  %v350 = vsel %vm349, %v347, %v344
  %v351 = vrcp.pop 2.0
  %v352 = vmul.f32 2.0, %v351
  %v353 = vsub.f32 1.0, %v352
  %v354 = vmul.f32 %v351, %v353
  %v355 = vadd.f32 %v351, %v354
  %vm356 = vweird.f32 %v351
  %v357 = vsel %vm356, %v351, %v355
  %v358 = vmul.f32 %v341, %v357
  %v359 = vmul.f32 %v350, %v357
  %v360 = vsel %vm327, %v319, %v358
  %v361 = vsel %vm328, %v321, %v359
  %v362 = vpack.c.bf16 %v360, %v360
  %v363 = vpack.c.bf16 %v361, %v361
  %vm364 = vcmask 60416
  %365 = vst.msk [vmem:[%s13] sm:$0xf] %vm364, %v362
  %366 = vst.msk [vmem:[%s13 + $0x4] sm:$0xf] %vm364, %v363
  // Predicated region
  $region54: #{tpu_custom_call.1} parent=0 // pred_check
    _
  $region55: #{tpu_custom_call.1} parent=0 // pred_check_branch
    %368 = sbr.rel (0) target = $region57
  $region56: #{tpu_custom_call.1} parent=0 // pred_region
    _
  $region57: #{tpu_custom_call.1} parent=0 // pred_fallthru
    _
  // Predicated region
  $region58: #{tpu_custom_call.1} parent=0 // pred_check
    _
  $region59: #{tpu_custom_call.1} parent=0 // pred_check_branch
    %370 = sbr.rel (0) target = $region61
  $region60: #{tpu_custom_call.1} parent=0 // pred_region
    _
  $region61: #{tpu_custom_call.1} parent=0 // pred_fallthru
    _

</llo_original>
